<compile_context>
chip_gen: v7x
topology: tpu7x:2x2x1
jax: 0.10.0
libtpu: 0.0.40
codegen_flags: <defaults>
</compile_context>

<pallas_src>
import functools

import jax
import jax.numpy as jnp
from jax.experimental import pallas as pl
from jax.experimental.pallas import tpu as pltpu

_LANES = 128
_MAX_TILE_S = 4096                      # lanes per grid step (multiple of 128)
_NCORES = 2                             # v7x: 2 TCs/chip; extra slice is free on 1-TC chips
_INPUT_VMEM_BUDGET = 8 * 1024 * 1024    # 2 inputs x 2 buffers; fits every default scoped limit


def _dice_kernel(p_ref, t_ref, inter_ref, union_ref, *, tile_s, n_chunks, s_total):
    c = pl.program_id(0)          # core split along S
    k = pl.program_id(1)          # step within this core's S range

    @pl.when(k == 0)
    def _init():
        inter_ref[...] = jnp.zeros_like(inter_ref)
        union_ref[...] = jnp.zeros_like(union_ref)

    # Global element offset of this (bc, tile_s) tile along the S axis.
    base = (c * pl.num_programs(1) + k) * tile_s
    lane = jax.lax.broadcasted_iota(jnp.int32, inter_ref.shape, 1)   # (bc, 128)

    inter_part = jnp.zeros(inter_ref.shape, jnp.float32)
    union_part = jnp.zeros(union_ref.shape, jnp.float32)
    for j in range(n_chunks):            # fold wide tile into 128-lane partials
        sl = pl.ds(j * _LANES, _LANES)
        p = p_ref[:, sl].astype(jnp.float32)
        t = t_ref[:, sl].astype(jnp.float32)
        valid = (base + j * _LANES + lane) < s_total   # masks ragged tail / OOB steps
        p = jnp.where(valid, p, 0.0)
        t = jnp.where(valid, t, 0.0)
        inter_part = inter_part + p * t
        union_part = union_part + (p + t)

    inter_ref[...] += inter_part
    union_ref[...] += union_part


def dice_loss(predictions, targets, smooth=1e-05):
    """Pallas implementation of DiceLoss.forward."""
    assert predictions.shape == targets.shape
    B, C = predictions.shape[0], predictions.shape[1]
    bc = B * C

    p2 = predictions.reshape(bc, -1)     # native dtype; no cast/pad copy in the wrapper
    t2 = targets.reshape(bc, -1)
    S = p2.shape[1]

    # Tile sizing: as wide as possible while double-buffered inputs stay within
    # the default scoped VMEM of every TPU generation (v5e 16MiB, v6e/v7x 32MiB).
    itemsize = max(p2.dtype.itemsize, t2.dtype.itemsize)
    s_ceil = pl.cdiv(S, _LANES) * _LANES
    max_tile = _INPUT_VMEM_BUDGET // (2 * 2 * bc * itemsize)
    max_tile = max(_LANES, (max_tile // _LANES) * _LANES)
    tile_s = min(_MAX_TILE_S, s_ceil, max_tile)

    n_steps = pl.cdiv(S, tile_s)
    steps_per_core = pl.cdiv(n_steps, _NCORES)
    n_chunks = tile_s // _LANES
    last_block = n_steps - 1

    def in_map(c, k):
        g = c * steps_per_core + k
        # Clamp so the DMA stays in bounds; fully-OOB steps are masked to zero.
        return (0, jnp.minimum(g, last_block))

    kernel = functools.partial(
        _dice_kernel, tile_s=tile_s, n_chunks=n_chunks, s_total=S)

    part_shape = jax.ShapeDtypeStruct((_NCORES, bc, _LANES), jnp.float32)
    part_spec = pl.BlockSpec((None, bc, _LANES), lambda c, k: (c, 0, 0))

    inter_p, union_p = pl.pallas_call(
        kernel,
        out_shape=(part_shape, part_shape),
        grid_spec=pltpu.PrefetchScalarGridSpec(
            num_scalar_prefetch=0,
            grid=(_NCORES, steps_per_core),
            in_specs=[
                pl.BlockSpec((bc, tile_s), in_map),
                pl.BlockSpec((bc, tile_s), in_map),
            ],
            out_specs=[part_spec, part_spec],
        ),
        compiler_params=pltpu.CompilerParams(
            dimension_semantics=("parallel", "arbitrary"),
        ),
    )(p2, t2)

    # Tiny epilogue: collapse cores + lanes, then dice scores and mean.
    intersection = jnp.sum(inter_p, axis=(0, 2))          # (bc,)
    union = jnp.sum(union_p, axis=(0, 2))                 # (bc,)
    dice_scores = (2.0 * intersection + smooth) / (union + smooth)
    return jnp.mean(1.0 - dice_scores)


def _dice_loss_ref(predictions, targets, smooth=1e-05):
    B, C = predictions.shape[0], predictions.shape[1]
    p = predictions.reshape(B, C, -1).astype(jnp.float32)
    t = targets.reshape(B, C, -1).astype(jnp.float32)
    intersection = jnp.sum(p * t, axis=2)
    union = jnp.sum(p, axis=2) + jnp.sum(t, axis=2)
    dice_scores = (2.0 * intersection + smooth) / (union + smooth)
    return jnp.mean(1.0 - dice_scores)


if __name__ == "__main__":
    key = jax.random.PRNGKey(0)
    kp, kt = jax.random.split(key)

    # 3D segmentation volumes: (batch, channels, depth, height, width)
    shape = (2, 4, 8, 16, 16)
    predictions = jax.nn.sigmoid(jax.random.normal(kp, shape, dtype=jnp.float32))
    targets = (jax.random.uniform(kt, shape) > 0.5).astype(jnp.float32)

    loss = dice_loss(predictions, targets)
    loss = jax.block_until_ready(loss)

    ref = _dice_loss_ref(predictions, targets)
    assert jnp.allclose(loss, ref, rtol=1e-5, atol=1e-6), (loss, ref)

    print("KERNEL_OK")
</pallas_src>

<mosaic_0001>
module attributes {stable_mosaic.version = 11 : i64} {
  func.func @_dice_kernel(%arg0: i32, %arg1: i32, %arg2: memref<8x2048xf32, #tpu.memory_space<vmem>>, %arg3: memref<8x2048xf32, #tpu.memory_space<vmem>>, %arg4: memref<1x8x128xf32, #tpu.memory_space<vmem>>, %arg5: memref<1x8x128xf32, #tpu.memory_space<vmem>>) attributes {dimension_semantics = [#tpu.dimension_semantics<parallel>, #tpu.dimension_semantics<arbitrary>], iteration_bounds = array<i64: 2, 1>, scalar_prefetch = 0 : i64, scratch_operands = 0 : i64, tpu.core_type = #tpu.core_type<tc>, window_params = [{transform_indices = @transform_0, window_bounds = array<i64: 8, 2048>}, {transform_indices = @transform_1, window_bounds = array<i64: 8, 2048>}, {transform_indices = @transform_2, window_bounds = array<i64: 1, 8, 128>}, {transform_indices = @transform_3, window_bounds = array<i64: 1, 8, 128>}]} {
    %c0_i32 = arith.constant 0 : i32
    %0 = arith.cmpi eq, %arg1, %c0_i32 : i32
    %1 = arith.extui %0 : i1 to i32
    %c0_i32_0 = arith.constant 0 : i32
    %2 = arith.cmpi ne, %1, %c0_i32_0 : i32
    scf.if %2 {
      %cst_111 = arith.constant 0.000000e+00 : f32
      %261 = vector.broadcast %cst_111 : f32 to vector<8x128xf32>
      %c0_112 = arith.constant 0 : index
      %c0_113 = arith.constant 0 : index
      %c0_114 = arith.constant 0 : index
      %262 = vector.load %arg4[%c0_112, %c0_113, %c0_114] : memref<1x8x128xf32, #tpu.memory_space<vmem>>, vector<1x8x128xf32>
      %263 = vector.shape_cast %262 : vector<1x8x128xf32> to vector<8x128xf32>
      %264 = vector.shape_cast %261 : vector<8x128xf32> to vector<1x8x128xf32>
      tpu.vector_store %arg4[%c0_112, %c0_113, %c0_114], %264 {strides = array<i32>} : memref<1x8x128xf32, #tpu.memory_space<vmem>>, vector<1x8x128xf32>,
      %cst_115 = arith.constant 0.000000e+00 : f32
      %265 = vector.broadcast %cst_115 : f32 to vector<8x128xf32>
      %c0_116 = arith.constant 0 : index
      %c0_117 = arith.constant 0 : index
      %c0_118 = arith.constant 0 : index
      %266 = vector.load %arg5[%c0_116, %c0_117, %c0_118] : memref<1x8x128xf32, #tpu.memory_space<vmem>>, vector<1x8x128xf32>
      %267 = vector.shape_cast %266 : vector<1x8x128xf32> to vector<8x128xf32>
      %268 = vector.shape_cast %265 : vector<8x128xf32> to vector<1x8x128xf32>
      tpu.vector_store %arg5[%c0_116, %c0_117, %c0_118], %268 {strides = array<i32>} : memref<1x8x128xf32, #tpu.memory_space<vmem>>, vector<1x8x128xf32>,
    } else {
    }
    %c1_i32 = arith.constant 1 : i32
    %3 = arith.muli %arg0, %c1_i32 : i32
    %4 = arith.addi %3, %arg1 : i32
    %c2048_i32 = arith.constant 2048 : i32
    %5 = arith.muli %4, %c2048_i32 : i32
    %6 = tpu.iota {dimensions = array<i32: 1>} : vector<8x128xi32>
    %cst = arith.constant 0.000000e+00 : f32
    %7 = vector.broadcast %cst : f32 to vector<8x128xf32>
    %cst_1 = arith.constant 0.000000e+00 : f32
    %8 = vector.broadcast %cst_1 : f32 to vector<8x128xf32>
    %c0 = arith.constant 0 : index
    %c0_2 = arith.constant 0 : index
    %9 = vector.load %arg2[%c0, %c0_2] : memref<8x2048xf32, #tpu.memory_space<vmem>>, vector<8x128xf32>
    %c0_3 = arith.constant 0 : index
    %c0_4 = arith.constant 0 : index
    %10 = vector.load %arg3[%c0_3, %c0_4] : memref<8x2048xf32, #tpu.memory_space<vmem>>, vector<8x128xf32>
    %c0_i32_5 = arith.constant 0 : i32
    %11 = arith.addi %5, %c0_i32_5 : i32
    %12 = vector.broadcast %11 : i32 to vector<8x128xi32>
    %13 = arith.addi %12, %6 : vector<8x128xi32>
    %c2048_i32_6 = arith.constant 2048 : i32
    %14 = vector.broadcast %c2048_i32_6 : i32 to vector<8x128xi32>
    %15 = arith.cmpi slt, %13, %14 : vector<8x128xi32>
    %cst_7 = arith.constant 0.000000e+00 : f32
    %16 = vector.broadcast %cst_7 : f32 to vector<8x128xf32>
    %17 = arith.select %15, %9, %16 : vector<8x128xi1>, vector<8x128xf32>
    %cst_8 = arith.constant 0.000000e+00 : f32
    %18 = vector.broadcast %cst_8 : f32 to vector<8x128xf32>
    %19 = arith.select %15, %10, %18 : vector<8x128xi1>, vector<8x128xf32>
    %20 = arith.mulf %17, %19 : vector<8x128xf32>
    %21 = arith.addf %7, %20 : vector<8x128xf32>
    %22 = arith.addf %17, %19 : vector<8x128xf32>
    %23 = arith.addf %8, %22 : vector<8x128xf32>
    %c0_9 = arith.constant 0 : index
    %c128 = arith.constant 128 : index
    %24 = vector.load %arg2[%c0_9, %c128] : memref<8x2048xf32, #tpu.memory_space<vmem>>, vector<8x128xf32>
    %c0_10 = arith.constant 0 : index
    %c128_11 = arith.constant 128 : index
    %25 = vector.load %arg3[%c0_10, %c128_11] : memref<8x2048xf32, #tpu.memory_space<vmem>>, vector<8x128xf32>
    %c128_i32 = arith.constant 128 : i32
    %26 = arith.addi %5, %c128_i32 : i32
    %27 = vector.broadcast %26 : i32 to vector<8x128xi32>
    %28 = arith.addi %27, %6 : vector<8x128xi32>
    %c2048_i32_12 = arith.constant 2048 : i32
    %29 = vector.broadcast %c2048_i32_12 : i32 to vector<8x128xi32>
    %30 = arith.cmpi slt, %28, %29 : vector<8x128xi32>
    %cst_13 = arith.constant 0.000000e+00 : f32
    %31 = vector.broadcast %cst_13 : f32 to vector<8x128xf32>
    %32 = arith.select %30, %24, %31 : vector<8x128xi1>, vector<8x128xf32>
    %cst_14 = arith.constant 0.000000e+00 : f32
    %33 = vector.broadcast %cst_14 : f32 to vector<8x128xf32>
    %34 = arith.select %30, %25, %33 : vector<8x128xi1>, vector<8x128xf32>
    %35 = arith.mulf %32, %34 : vector<8x128xf32>
    %36 = arith.addf %21, %35 : vector<8x128xf32>
    %37 = arith.addf %32, %34 : vector<8x128xf32>
    %38 = arith.addf %23, %37 : vector<8x128xf32>
    %c0_15 = arith.constant 0 : index
    %c256 = arith.constant 256 : index
    %39 = vector.load %arg2[%c0_15, %c256] : memref<8x2048xf32, #tpu.memory_space<vmem>>, vector<8x128xf32>
    %c0_16 = arith.constant 0 : index
    %c256_17 = arith.constant 256 : index
    %40 = vector.load %arg3[%c0_16, %c256_17] : memref<8x2048xf32, #tpu.memory_space<vmem>>, vector<8x128xf32>
    %c256_i32 = arith.constant 256 : i32
    %41 = arith.addi %5, %c256_i32 : i32
    %42 = vector.broadcast %41 : i32 to vector<8x128xi32>
    %43 = arith.addi %42, %6 : vector<8x128xi32>
    %c2048_i32_18 = arith.constant 2048 : i32
    %44 = vector.broadcast %c2048_i32_18 : i32 to vector<8x128xi32>
    %45 = arith.cmpi slt, %43, %44 : vector<8x128xi32>
    %cst_19 = arith.constant 0.000000e+00 : f32
    %46 = vector.broadcast %cst_19 : f32 to vector<8x128xf32>
    %47 = arith.select %45, %39, %46 : vector<8x128xi1>, vector<8x128xf32>
    %cst_20 = arith.constant 0.000000e+00 : f32
    %48 = vector.broadcast %cst_20 : f32 to vector<8x128xf32>
    %49 = arith.select %45, %40, %48 : vector<8x128xi1>, vector<8x128xf32>
    %50 = arith.mulf %47, %49 : vector<8x128xf32>
    %51 = arith.addf %36, %50 : vector<8x128xf32>
    %52 = arith.addf %47, %49 : vector<8x128xf32>
    %53 = arith.addf %38, %52 : vector<8x128xf32>
    %c0_21 = arith.constant 0 : index
    %c384 = arith.constant 384 : index
    %54 = vector.load %arg2[%c0_21, %c384] : memref<8x2048xf32, #tpu.memory_space<vmem>>, vector<8x128xf32>
    %c0_22 = arith.constant 0 : index
    %c384_23 = arith.constant 384 : index
    %55 = vector.load %arg3[%c0_22, %c384_23] : memref<8x2048xf32, #tpu.memory_space<vmem>>, vector<8x128xf32>
    %c384_i32 = arith.constant 384 : i32
    %56 = arith.addi %5, %c384_i32 : i32
    %57 = vector.broadcast %56 : i32 to vector<8x128xi32>
    %58 = arith.addi %57, %6 : vector<8x128xi32>
    %c2048_i32_24 = arith.constant 2048 : i32
    %59 = vector.broadcast %c2048_i32_24 : i32 to vector<8x128xi32>
    %60 = arith.cmpi slt, %58, %59 : vector<8x128xi32>
    %cst_25 = arith.constant 0.000000e+00 : f32
    %61 = vector.broadcast %cst_25 : f32 to vector<8x128xf32>
    %62 = arith.select %60, %54, %61 : vector<8x128xi1>, vector<8x128xf32>
    %cst_26 = arith.constant 0.000000e+00 : f32
    %63 = vector.broadcast %cst_26 : f32 to vector<8x128xf32>
    %64 = arith.select %60, %55, %63 : vector<8x128xi1>, vector<8x128xf32>
    %65 = arith.mulf %62, %64 : vector<8x128xf32>
    %66 = arith.addf %51, %65 : vector<8x128xf32>
    %67 = arith.addf %62, %64 : vector<8x128xf32>
    %68 = arith.addf %53, %67 : vector<8x128xf32>
    %c0_27 = arith.constant 0 : index
    %c512 = arith.constant 512 : index
    %69 = vector.load %arg2[%c0_27, %c512] : memref<8x2048xf32, #tpu.memory_space<vmem>>, vector<8x128xf32>
    %c0_28 = arith.constant 0 : index
    %c512_29 = arith.constant 512 : index
    %70 = vector.load %arg3[%c0_28, %c512_29] : memref<8x2048xf32, #tpu.memory_space<vmem>>, vector<8x128xf32>
    %c512_i32 = arith.constant 512 : i32
    %71 = arith.addi %5, %c512_i32 : i32
    %72 = vector.broadcast %71 : i32 to vector<8x128xi32>
    %73 = arith.addi %72, %6 : vector<8x128xi32>
    %c2048_i32_30 = arith.constant 2048 : i32
    %74 = vector.broadcast %c2048_i32_30 : i32 to vector<8x128xi32>
    %75 = arith.cmpi slt, %73, %74 : vector<8x128xi32>
    %cst_31 = arith.constant 0.000000e+00 : f32
    %76 = vector.broadcast %cst_31 : f32 to vector<8x128xf32>
    %77 = arith.select %75, %69, %76 : vector<8x128xi1>, vector<8x128xf32>
    %cst_32 = arith.constant 0.000000e+00 : f32
    %78 = vector.broadcast %cst_32 : f32 to vector<8x128xf32>
    %79 = arith.select %75, %70, %78 : vector<8x128xi1>, vector<8x128xf32>
    %80 = arith.mulf %77, %79 : vector<8x128xf32>
    %81 = arith.addf %66, %80 : vector<8x128xf32>
    %82 = arith.addf %77, %79 : vector<8x128xf32>
    %83 = arith.addf %68, %82 : vector<8x128xf32>
    %c0_33 = arith.constant 0 : index
    %c640 = arith.constant 640 : index
    %84 = vector.load %arg2[%c0_33, %c640] : memref<8x2048xf32, #tpu.memory_space<vmem>>, vector<8x128xf32>
    %c0_34 = arith.constant 0 : index
    %c640_35 = arith.constant 640 : index
    %85 = vector.load %arg3[%c0_34, %c640_35] : memref<8x2048xf32, #tpu.memory_space<vmem>>, vector<8x128xf32>
    %c640_i32 = arith.constant 640 : i32
    %86 = arith.addi %5, %c640_i32 : i32
    %87 = vector.broadcast %86 : i32 to vector<8x128xi32>
    %88 = arith.addi %87, %6 : vector<8x128xi32>
    %c2048_i32_36 = arith.constant 2048 : i32
    %89 = vector.broadcast %c2048_i32_36 : i32 to vector<8x128xi32>
    %90 = arith.cmpi slt, %88, %89 : vector<8x128xi32>
    %cst_37 = arith.constant 0.000000e+00 : f32
    %91 = vector.broadcast %cst_37 : f32 to vector<8x128xf32>
    %92 = arith.select %90, %84, %91 : vector<8x128xi1>, vector<8x128xf32>
    %cst_38 = arith.constant 0.000000e+00 : f32
    %93 = vector.broadcast %cst_38 : f32 to vector<8x128xf32>
    %94 = arith.select %90, %85, %93 : vector<8x128xi1>, vector<8x128xf32>
    %95 = arith.mulf %92, %94 : vector<8x128xf32>
    %96 = arith.addf %81, %95 : vector<8x128xf32>
    %97 = arith.addf %92, %94 : vector<8x128xf32>
    %98 = arith.addf %83, %97 : vector<8x128xf32>
    %c0_39 = arith.constant 0 : index
    %c768 = arith.constant 768 : index
    %99 = vector.load %arg2[%c0_39, %c768] : memref<8x2048xf32, #tpu.memory_space<vmem>>, vector<8x128xf32>
    %c0_40 = arith.constant 0 : index
    %c768_41 = arith.constant 768 : index
    %100 = vector.load %arg3[%c0_40, %c768_41] : memref<8x2048xf32, #tpu.memory_space<vmem>>, vector<8x128xf32>
    %c768_i32 = arith.constant 768 : i32
    %101 = arith.addi %5, %c768_i32 : i32
    %102 = vector.broadcast %101 : i32 to vector<8x128xi32>
    %103 = arith.addi %102, %6 : vector<8x128xi32>
    %c2048_i32_42 = arith.constant 2048 : i32
    %104 = vector.broadcast %c2048_i32_42 : i32 to vector<8x128xi32>
    %105 = arith.cmpi slt, %103, %104 : vector<8x128xi32>
    %cst_43 = arith.constant 0.000000e+00 : f32
    %106 = vector.broadcast %cst_43 : f32 to vector<8x128xf32>
    %107 = arith.select %105, %99, %106 : vector<8x128xi1>, vector<8x128xf32>
    %cst_44 = arith.constant 0.000000e+00 : f32
    %108 = vector.broadcast %cst_44 : f32 to vector<8x128xf32>
    %109 = arith.select %105, %100, %108 : vector<8x128xi1>, vector<8x128xf32>
    %110 = arith.mulf %107, %109 : vector<8x128xf32>
    %111 = arith.addf %96, %110 : vector<8x128xf32>
    %112 = arith.addf %107, %109 : vector<8x128xf32>
    %113 = arith.addf %98, %112 : vector<8x128xf32>
    %c0_45 = arith.constant 0 : index
    %c896 = arith.constant 896 : index
    %114 = vector.load %arg2[%c0_45, %c896] : memref<8x2048xf32, #tpu.memory_space<vmem>>, vector<8x128xf32>
    %c0_46 = arith.constant 0 : index
    %c896_47 = arith.constant 896 : index
    %115 = vector.load %arg3[%c0_46, %c896_47] : memref<8x2048xf32, #tpu.memory_space<vmem>>, vector<8x128xf32>
    %c896_i32 = arith.constant 896 : i32
    %116 = arith.addi %5, %c896_i32 : i32
    %117 = vector.broadcast %116 : i32 to vector<8x128xi32>
    %118 = arith.addi %117, %6 : vector<8x128xi32>
    %c2048_i32_48 = arith.constant 2048 : i32
    %119 = vector.broadcast %c2048_i32_48 : i32 to vector<8x128xi32>
    %120 = arith.cmpi slt, %118, %119 : vector<8x128xi32>
    %cst_49 = arith.constant 0.000000e+00 : f32
    %121 = vector.broadcast %cst_49 : f32 to vector<8x128xf32>
    %122 = arith.select %120, %114, %121 : vector<8x128xi1>, vector<8x128xf32>
    %cst_50 = arith.constant 0.000000e+00 : f32
    %123 = vector.broadcast %cst_50 : f32 to vector<8x128xf32>
    %124 = arith.select %120, %115, %123 : vector<8x128xi1>, vector<8x128xf32>
    %125 = arith.mulf %122, %124 : vector<8x128xf32>
    %126 = arith.addf %111, %125 : vector<8x128xf32>
    %127 = arith.addf %122, %124 : vector<8x128xf32>
    %128 = arith.addf %113, %127 : vector<8x128xf32>
    %c0_51 = arith.constant 0 : index
    %c1024 = arith.constant 1024 : index
    %129 = vector.load %arg2[%c0_51, %c1024] : memref<8x2048xf32, #tpu.memory_space<vmem>>, vector<8x128xf32>
    %c0_52 = arith.constant 0 : index
    %c1024_53 = arith.constant 1024 : index
    %130 = vector.load %arg3[%c0_52, %c1024_53] : memref<8x2048xf32, #tpu.memory_space<vmem>>, vector<8x128xf32>
    %c1024_i32 = arith.constant 1024 : i32
    %131 = arith.addi %5, %c1024_i32 : i32
    %132 = vector.broadcast %131 : i32 to vector<8x128xi32>
    %133 = arith.addi %132, %6 : vector<8x128xi32>
    %c2048_i32_54 = arith.constant 2048 : i32
    %134 = vector.broadcast %c2048_i32_54 : i32 to vector<8x128xi32>
    %135 = arith.cmpi slt, %133, %134 : vector<8x128xi32>
    %cst_55 = arith.constant 0.000000e+00 : f32
    %136 = vector.broadcast %cst_55 : f32 to vector<8x128xf32>
    %137 = arith.select %135, %129, %136 : vector<8x128xi1>, vector<8x128xf32>
    %cst_56 = arith.constant 0.000000e+00 : f32
    %138 = vector.broadcast %cst_56 : f32 to vector<8x128xf32>
    %139 = arith.select %135, %130, %138 : vector<8x128xi1>, vector<8x128xf32>
    %140 = arith.mulf %137, %139 : vector<8x128xf32>
    %141 = arith.addf %126, %140 : vector<8x128xf32>
    %142 = arith.addf %137, %139 : vector<8x128xf32>
    %143 = arith.addf %128, %142 : vector<8x128xf32>
    %c0_57 = arith.constant 0 : index
    %c1152 = arith.constant 1152 : index
    %144 = vector.load %arg2[%c0_57, %c1152] : memref<8x2048xf32, #tpu.memory_space<vmem>>, vector<8x128xf32>
    %c0_58 = arith.constant 0 : index
    %c1152_59 = arith.constant 1152 : index
    %145 = vector.load %arg3[%c0_58, %c1152_59] : memref<8x2048xf32, #tpu.memory_space<vmem>>, vector<8x128xf32>
    %c1152_i32 = arith.constant 1152 : i32
    %146 = arith.addi %5, %c1152_i32 : i32
    %147 = vector.broadcast %146 : i32 to vector<8x128xi32>
    %148 = arith.addi %147, %6 : vector<8x128xi32>
    %c2048_i32_60 = arith.constant 2048 : i32
    %149 = vector.broadcast %c2048_i32_60 : i32 to vector<8x128xi32>
    %150 = arith.cmpi slt, %148, %149 : vector<8x128xi32>
    %cst_61 = arith.constant 0.000000e+00 : f32
    %151 = vector.broadcast %cst_61 : f32 to vector<8x128xf32>
    %152 = arith.select %150, %144, %151 : vector<8x128xi1>, vector<8x128xf32>
    %cst_62 = arith.constant 0.000000e+00 : f32
    %153 = vector.broadcast %cst_62 : f32 to vector<8x128xf32>
    %154 = arith.select %150, %145, %153 : vector<8x128xi1>, vector<8x128xf32>
    %155 = arith.mulf %152, %154 : vector<8x128xf32>
    %156 = arith.addf %141, %155 : vector<8x128xf32>
    %157 = arith.addf %152, %154 : vector<8x128xf32>
    %158 = arith.addf %143, %157 : vector<8x128xf32>
    %c0_63 = arith.constant 0 : index
    %c1280 = arith.constant 1280 : index
    %159 = vector.load %arg2[%c0_63, %c1280] : memref<8x2048xf32, #tpu.memory_space<vmem>>, vector<8x128xf32>
    %c0_64 = arith.constant 0 : index
    %c1280_65 = arith.constant 1280 : index
    %160 = vector.load %arg3[%c0_64, %c1280_65] : memref<8x2048xf32, #tpu.memory_space<vmem>>, vector<8x128xf32>
    %c1280_i32 = arith.constant 1280 : i32
    %161 = arith.addi %5, %c1280_i32 : i32
    %162 = vector.broadcast %161 : i32 to vector<8x128xi32>
    %163 = arith.addi %162, %6 : vector<8x128xi32>
    %c2048_i32_66 = arith.constant 2048 : i32
    %164 = vector.broadcast %c2048_i32_66 : i32 to vector<8x128xi32>
    %165 = arith.cmpi slt, %163, %164 : vector<8x128xi32>
    %cst_67 = arith.constant 0.000000e+00 : f32
    %166 = vector.broadcast %cst_67 : f32 to vector<8x128xf32>
    %167 = arith.select %165, %159, %166 : vector<8x128xi1>, vector<8x128xf32>
    %cst_68 = arith.constant 0.000000e+00 : f32
    %168 = vector.broadcast %cst_68 : f32 to vector<8x128xf32>
    %169 = arith.select %165, %160, %168 : vector<8x128xi1>, vector<8x128xf32>
    %170 = arith.mulf %167, %169 : vector<8x128xf32>
    %171 = arith.addf %156, %170 : vector<8x128xf32>
    %172 = arith.addf %167, %169 : vector<8x128xf32>
    %173 = arith.addf %158, %172 : vector<8x128xf32>
    %c0_69 = arith.constant 0 : index
    %c1408 = arith.constant 1408 : index
    %174 = vector.load %arg2[%c0_69, %c1408] : memref<8x2048xf32, #tpu.memory_space<vmem>>, vector<8x128xf32>
    %c0_70 = arith.constant 0 : index
    %c1408_71 = arith.constant 1408 : index
    %175 = vector.load %arg3[%c0_70, %c1408_71] : memref<8x2048xf32, #tpu.memory_space<vmem>>, vector<8x128xf32>
    %c1408_i32 = arith.constant 1408 : i32
    %176 = arith.addi %5, %c1408_i32 : i32
    %177 = vector.broadcast %176 : i32 to vector<8x128xi32>
    %178 = arith.addi %177, %6 : vector<8x128xi32>
    %c2048_i32_72 = arith.constant 2048 : i32
    %179 = vector.broadcast %c2048_i32_72 : i32 to vector<8x128xi32>
    %180 = arith.cmpi slt, %178, %179 : vector<8x128xi32>
    %cst_73 = arith.constant 0.000000e+00 : f32
    %181 = vector.broadcast %cst_73 : f32 to vector<8x128xf32>
    %182 = arith.select %180, %174, %181 : vector<8x128xi1>, vector<8x128xf32>
    %cst_74 = arith.constant 0.000000e+00 : f32
    %183 = vector.broadcast %cst_74 : f32 to vector<8x128xf32>
    %184 = arith.select %180, %175, %183 : vector<8x128xi1>, vector<8x128xf32>
    %185 = arith.mulf %182, %184 : vector<8x128xf32>
    %186 = arith.addf %171, %185 : vector<8x128xf32>
    %187 = arith.addf %182, %184 : vector<8x128xf32>
    %188 = arith.addf %173, %187 : vector<8x128xf32>
    %c0_75 = arith.constant 0 : index
    %c1536 = arith.constant 1536 : index
    %189 = vector.load %arg2[%c0_75, %c1536] : memref<8x2048xf32, #tpu.memory_space<vmem>>, vector<8x128xf32>
    %c0_76 = arith.constant 0 : index
    %c1536_77 = arith.constant 1536 : index
    %190 = vector.load %arg3[%c0_76, %c1536_77] : memref<8x2048xf32, #tpu.memory_space<vmem>>, vector<8x128xf32>
    %c1536_i32 = arith.constant 1536 : i32
    %191 = arith.addi %5, %c1536_i32 : i32
    %192 = vector.broadcast %191 : i32 to vector<8x128xi32>
    %193 = arith.addi %192, %6 : vector<8x128xi32>
    %c2048_i32_78 = arith.constant 2048 : i32
    %194 = vector.broadcast %c2048_i32_78 : i32 to vector<8x128xi32>
    %195 = arith.cmpi slt, %193, %194 : vector<8x128xi32>
    %cst_79 = arith.constant 0.000000e+00 : f32
    %196 = vector.broadcast %cst_79 : f32 to vector<8x128xf32>
    %197 = arith.select %195, %189, %196 : vector<8x128xi1>, vector<8x128xf32>
    %cst_80 = arith.constant 0.000000e+00 : f32
    %198 = vector.broadcast %cst_80 : f32 to vector<8x128xf32>
    %199 = arith.select %195, %190, %198 : vector<8x128xi1>, vector<8x128xf32>
    %200 = arith.mulf %197, %199 : vector<8x128xf32>
    %201 = arith.addf %186, %200 : vector<8x128xf32>
    %202 = arith.addf %197, %199 : vector<8x128xf32>
    %203 = arith.addf %188, %202 : vector<8x128xf32>
    %c0_81 = arith.constant 0 : index
    %c1664 = arith.constant 1664 : index
    %204 = vector.load %arg2[%c0_81, %c1664] : memref<8x2048xf32, #tpu.memory_space<vmem>>, vector<8x128xf32>
    %c0_82 = arith.constant 0 : index
    %c1664_83 = arith.constant 1664 : index
    %205 = vector.load %arg3[%c0_82, %c1664_83] : memref<8x2048xf32, #tpu.memory_space<vmem>>, vector<8x128xf32>
    %c1664_i32 = arith.constant 1664 : i32
    %206 = arith.addi %5, %c1664_i32 : i32
    %207 = vector.broadcast %206 : i32 to vector<8x128xi32>
    %208 = arith.addi %207, %6 : vector<8x128xi32>
    %c2048_i32_84 = arith.constant 2048 : i32
    %209 = vector.broadcast %c2048_i32_84 : i32 to vector<8x128xi32>
    %210 = arith.cmpi slt, %208, %209 : vector<8x128xi32>
    %cst_85 = arith.constant 0.000000e+00 : f32
    %211 = vector.broadcast %cst_85 : f32 to vector<8x128xf32>
    %212 = arith.select %210, %204, %211 : vector<8x128xi1>, vector<8x128xf32>
    %cst_86 = arith.constant 0.000000e+00 : f32
    %213 = vector.broadcast %cst_86 : f32 to vector<8x128xf32>
    %214 = arith.select %210, %205, %213 : vector<8x128xi1>, vector<8x128xf32>
    %215 = arith.mulf %212, %214 : vector<8x128xf32>
    %216 = arith.addf %201, %215 : vector<8x128xf32>
    %217 = arith.addf %212, %214 : vector<8x128xf32>
    %218 = arith.addf %203, %217 : vector<8x128xf32>
    %c0_87 = arith.constant 0 : index
    %c1792 = arith.constant 1792 : index
    %219 = vector.load %arg2[%c0_87, %c1792] : memref<8x2048xf32, #tpu.memory_space<vmem>>, vector<8x128xf32>
    %c0_88 = arith.constant 0 : index
    %c1792_89 = arith.constant 1792 : index
    %220 = vector.load %arg3[%c0_88, %c1792_89] : memref<8x2048xf32, #tpu.memory_space<vmem>>, vector<8x128xf32>
    %c1792_i32 = arith.constant 1792 : i32
    %221 = arith.addi %5, %c1792_i32 : i32
    %222 = vector.broadcast %221 : i32 to vector<8x128xi32>
    %223 = arith.addi %222, %6 : vector<8x128xi32>
    %c2048_i32_90 = arith.constant 2048 : i32
    %224 = vector.broadcast %c2048_i32_90 : i32 to vector<8x128xi32>
    %225 = arith.cmpi slt, %223, %224 : vector<8x128xi32>
    %cst_91 = arith.constant 0.000000e+00 : f32
    %226 = vector.broadcast %cst_91 : f32 to vector<8x128xf32>
    %227 = arith.select %225, %219, %226 : vector<8x128xi1>, vector<8x128xf32>
    %cst_92 = arith.constant 0.000000e+00 : f32
    %228 = vector.broadcast %cst_92 : f32 to vector<8x128xf32>
    %229 = arith.select %225, %220, %228 : vector<8x128xi1>, vector<8x128xf32>
    %230 = arith.mulf %227, %229 : vector<8x128xf32>
    %231 = arith.addf %216, %230 : vector<8x128xf32>
    %232 = arith.addf %227, %229 : vector<8x128xf32>
    %233 = arith.addf %218, %232 : vector<8x128xf32>
    %c0_93 = arith.constant 0 : index
    %c1920 = arith.constant 1920 : index
    %234 = vector.load %arg2[%c0_93, %c1920] : memref<8x2048xf32, #tpu.memory_space<vmem>>, vector<8x128xf32>
    %c0_94 = arith.constant 0 : index
    %c1920_95 = arith.constant 1920 : index
    %235 = vector.load %arg3[%c0_94, %c1920_95] : memref<8x2048xf32, #tpu.memory_space<vmem>>, vector<8x128xf32>
    %c1920_i32 = arith.constant 1920 : i32
    %236 = arith.addi %5, %c1920_i32 : i32
    %237 = vector.broadcast %236 : i32 to vector<8x128xi32>
    %238 = arith.addi %237, %6 : vector<8x128xi32>
    %c2048_i32_96 = arith.constant 2048 : i32
    %239 = vector.broadcast %c2048_i32_96 : i32 to vector<8x128xi32>
    %240 = arith.cmpi slt, %238, %239 : vector<8x128xi32>
    %cst_97 = arith.constant 0.000000e+00 : f32
    %241 = vector.broadcast %cst_97 : f32 to vector<8x128xf32>
    %242 = arith.select %240, %234, %241 : vector<8x128xi1>, vector<8x128xf32>
    %cst_98 = arith.constant 0.000000e+00 : f32
    %243 = vector.broadcast %cst_98 : f32 to vector<8x128xf32>
    %244 = arith.select %240, %235, %243 : vector<8x128xi1>, vector<8x128xf32>
    %245 = arith.mulf %242, %244 : vector<8x128xf32>
    %246 = arith.addf %231, %245 : vector<8x128xf32>
    %247 = arith.addf %242, %244 : vector<8x128xf32>
    %248 = arith.addf %233, %247 : vector<8x128xf32>
    %c0_99 = arith.constant 0 : index
    %c0_100 = arith.constant 0 : index
    %c0_101 = arith.constant 0 : index
    %249 = vector.load %arg4[%c0_99, %c0_100, %c0_101] : memref<1x8x128xf32, #tpu.memory_space<vmem>>, vector<1x8x128xf32>
    %250 = vector.shape_cast %249 : vector<1x8x128xf32> to vector<8x128xf32>
    %251 = arith.addf %250, %246 : vector<8x128xf32>
    %c0_102 = arith.constant 0 : index
    %c0_103 = arith.constant 0 : index
    %c0_104 = arith.constant 0 : index
    %252 = vector.load %arg4[%c0_102, %c0_103, %c0_104] : memref<1x8x128xf32, #tpu.memory_space<vmem>>, vector<1x8x128xf32>
    %253 = vector.shape_cast %252 : vector<1x8x128xf32> to vector<8x128xf32>
    %254 = vector.shape_cast %251 : vector<8x128xf32> to vector<1x8x128xf32>
    tpu.vector_store %arg4[%c0_102, %c0_103, %c0_104], %254 {strides = array<i32>} : memref<1x8x128xf32, #tpu.memory_space<vmem>>, vector<1x8x128xf32>,
    %c0_105 = arith.constant 0 : index
    %c0_106 = arith.constant 0 : index
    %c0_107 = arith.constant 0 : index
    %255 = vector.load %arg5[%c0_105, %c0_106, %c0_107] : memref<1x8x128xf32, #tpu.memory_space<vmem>>, vector<1x8x128xf32>
    %256 = vector.shape_cast %255 : vector<1x8x128xf32> to vector<8x128xf32>
    %257 = arith.addf %256, %248 : vector<8x128xf32>
    %c0_108 = arith.constant 0 : index
    %c0_109 = arith.constant 0 : index
    %c0_110 = arith.constant 0 : index
    %258 = vector.load %arg5[%c0_108, %c0_109, %c0_110] : memref<1x8x128xf32, #tpu.memory_space<vmem>>, vector<1x8x128xf32>
    %259 = vector.shape_cast %258 : vector<1x8x128xf32> to vector<8x128xf32>
    %260 = vector.shape_cast %257 : vector<8x128xf32> to vector<1x8x128xf32>
    tpu.vector_store %arg5[%c0_108, %c0_109, %c0_110], %260 {strides = array<i32>} : memref<1x8x128xf32, #tpu.memory_space<vmem>>, vector<1x8x128xf32>,
    return
  }
  func.func @transform_0(%arg0: i32, %arg1: i32) -> (i32, i32) {
    %c1_i32 = arith.constant 1 : i32
    %0 = arith.muli %arg0, %c1_i32 : i32
    %1 = arith.addi %0, %arg1 : i32
    %c0_i32 = arith.constant 0 : i32
    %2 = arith.minsi %1, %c0_i32 : i32
    %c0_i32_0 = arith.constant 0 : i32
    %c0_i32_1 = arith.constant 0 : i32
    return %c0_i32_0, %2 : i32, i32
  }
  func.func @transform_1(%arg0: i32, %arg1: i32) -> (i32, i32) {
    %c1_i32 = arith.constant 1 : i32
    %0 = arith.muli %arg0, %c1_i32 : i32
    %1 = arith.addi %0, %arg1 : i32
    %c0_i32 = arith.constant 0 : i32
    %2 = arith.minsi %1, %c0_i32 : i32
    %c0_i32_0 = arith.constant 0 : i32
    %c0_i32_1 = arith.constant 0 : i32
    return %c0_i32_0, %2 : i32, i32
  }
  func.func @transform_2(%arg0: i32, %arg1: i32) -> (i32, i32, i32) {
    %c0_i32 = arith.constant 0 : i32
    %c0_i32_0 = arith.constant 0 : i32
    %c0_i32_1 = arith.constant 0 : i32
    return %arg0, %c0_i32, %c0_i32_0 : i32, i32, i32
  }
  func.func @transform_3(%arg0: i32, %arg1: i32) -> (i32, i32, i32) {
    %c0_i32 = arith.constant 0 : i32
    %c0_i32_0 = arith.constant 0 : i32
    %c0_i32_1 = arith.constant 0 : i32
    return %arg0, %c0_i32, %c0_i32_0 : i32, i32, i32
  }
}

</mosaic_0001>

<llo_original>
// kernel: tpu_custom_call.1
$region0: #{tpu_custom_call.1}
  #allocation0 [shape = 'u32[]', space=smem, size = 0x4, offset = 0x4, fixed_abs, tag = 'smem constant byte address 0x4 - core index']
  #allocation1 [shape = 'u32[144,128]{1,0:T(1,128)}', space=vmem, size = 0x12000, scoped, tag = 'internal scratch']
  %s0 = inlined_call_operand.hbm [shape: f32[8,2048], index: 0, kind: input, shape index: {}]
  %s1 = inlined_call_operand.hbm [shape: f32[8,2048], index: 1, kind: input, shape index: {}]
  %s2 = inlined_call_operand.hbm [shape: f32[2,8,128], index: 2, kind: output, shape index: {0}]
  %s3 = inlined_call_operand.hbm [shape: f32[2,8,128], index: 3, kind: output, shape index: {1}]
  %4 = xla_tuple %s2, %s3
  %s5 = sld [smem:[#allocation0]]
  $region61: #{tpu_custom_call.1} parent=0
    _
  %s7 = ssub.s32 1, %s5
  %s8 = scalar_select 0, %s7, %s5
  $region1: #{tpu_custom_call.1} parent=0
    #allocation2 [shape = 'u8[131072]{0}', space=vmem, size = 0x20000, scoped, tag = 'input window, operand 0']
    #allocation3 [shape = 's32[2]{0}', space=sflag, size = 0x8, scoped, tag = 'scoped memory for tpu_custom_call.1']
    #allocation4 [shape = 's32[2]{0}', space=sflag, size = 0x8, scoped, tag = 'scoped memory for tpu_custom_call.1']
    #allocation5 [shape = 'u8[131072]{0}', space=vmem, size = 0x20000, scoped, tag = 'input window, operand 1']
    #allocation6 [shape = 's32[2]{0}', space=sflag, size = 0x8, scoped, tag = 'scoped memory for tpu_custom_call.1']
    #allocation7 [shape = 'u8[8192]{0}', space=vmem, size = 0x2000, scoped, tag = 'output window, operand 0']
    #allocation8 [shape = 'u8[8192]{0}', space=vmem, size = 0x2000, scoped, tag = 'output window, operand 1']
    #allocation9 [shape = 's32[2]{0}', space=sflag, size = 0x8, scoped, tag = 'scoped memory for tpu_custom_call.1']
    %9 = vsyncpa [#allocation3], 0
    %s10 = scalar_lea.sflag [#allocation3], 1
    %11 = vsyncpa %s10, 0
    %12 = vsyncpa [#allocation6], 0
    %s13 = scalar_lea.sflag [#allocation6], 1
    %14 = vsyncpa %s13, 0
    %15 = vsyncpa [#allocation4], 0
    %s16 = scalar_lea.sflag [#allocation4], 1
    %17 = vsyncpa %s16, 0
    %18 = vsyncpa [#allocation9], 0
    %s19 = scalar_lea.sflag [#allocation9], 1
    %20 = vsyncpa %s19, 0
    loop: start=0, step=1, limit=4
    $region2: #{tpu_custom_call.1} parent=1 // loop_pre_header
      _
    $region3: #{tpu_custom_call.1} parent=1 // loop_header
      %s22 = sphi 0, %s26
      %p23 = scmp.ge.s32.totalorder %s22, 4
      %s29 = sphi 0, %s41
      %s30 = sphi 0, %s37
      %s31 = sphi 0, %s29
      %s32 = sphi 0, %s30
      %s33 = sphi 0, %s31
      %s34 = sphi 0, %s32
      %s50 = sphi 0, %s52
      %s53 = sphi 0, %s50
      %s54 = sphi 0, %s53
      %s70 = sphi 0, %s54
      %s82 = sphi 0, %s84
      %s85 = sphi 0, %s82
      %s86 = sphi 0, %s85
      %s102 = sphi 0, %s86
      %s108 = sphi 0, %s110
      %s111 = sphi 0, %s108
      %s112 = sphi 0, %s111
      %s128 = sphi 0, %s112
      %s134 = sphi 0, %s136
      %s137 = sphi 0, %s134
      %s138 = sphi 0, %s137
      %s154 = sphi 0, %s138
    $region4: #{tpu_custom_call.1} parent=1 // loop_header_branch
      %25 = sbr.rel (%p23) target = $region8
    $region5: #{tpu_custom_call.1} parent=1 // loop_body
      %s27 = ssub.s32 %s22, 1
      %s28 = ssub.s32 %s22, 2
      %s35 = sadd.s32 1, %s30
      %p36 = scmp.ge.s32.totalorder %s35, 1
      %s37 = scalar_select %p36, 0, %s35
      %s38 = sadd.s32 1, %s29
      %s39 = scalar_select %p36, %s38, %s29
      %p40 = scmp.ge.s32.totalorder %s39, 2
      %s41 = scalar_select %p40, 0, %s39
      %s42 = sadd.s32 %s29, %s30
      %p43 = scmp.lt.s32.totalorder %s42, 0
      %s44 = scalar_select %p43, %s42, 0
      %s45 = sadd.s32 %s41, %s37
      %p46 = scmp.lt.s32.totalorder %s45, 0
      %s47 = scalar_select %p46, %s45, 0
      %s48 = ssub.s32 %s44, %s47
      %p49 = scmp.eq.s32.totalorder %s48, 0
      %s51 = sadd.s32 %s50, 1
      %s52 = scalar_select %p49, %s50, %s51
      %p55 = pneg %p49
      %p56 = scmp.eq.s32.totalorder %s22, 1
      %p57 = por %p55, %p56
      %p58 = scmp.ne.s32.totalorder %s50, %s53
      %p59 = scmp.eq.s32.totalorder %s22, 0
      %p60 = por %p58, %p59
      %p61 = scmp.ne.s32.totalorder %s50, %s53
      %p62 = scmp.eq.s32.totalorder %s27, 1
      %p63 = por %p61, %p62
      %p64 = scmp.ne.s32.totalorder %s53, %s54
      %p65 = scmp.eq.s32.totalorder %s27, 0
      %p66 = por %p64, %p65
      %p67 = scmp.ne.s32.totalorder %s53, %s54
      %p68 = scmp.eq.s32.totalorder %s28, 1
      %p69 = por %p67, %p68
      %p71 = scmp.ne.s32.totalorder %s54, %s70
      %p72 = scmp.eq.s32.totalorder %s28, 0
      %p73 = por %p71, %p72
      %s74 = sadd.s32 %s29, %s30
      %p75 = scmp.lt.s32.totalorder %s74, 0
      %s76 = scalar_select %p75, %s74, 0
      %s77 = sadd.s32 %s41, %s37
      %p78 = scmp.lt.s32.totalorder %s77, 0
      %s79 = scalar_select %p78, %s77, 0
      %s80 = ssub.s32 %s76, %s79
      %p81 = scmp.eq.s32.totalorder %s80, 0
      %s83 = sadd.s32 %s82, 1
      %s84 = scalar_select %p81, %s82, %s83
      %p87 = pneg %p81
      %p88 = scmp.eq.s32.totalorder %s22, 1
      %p89 = por %p87, %p88
      %p90 = scmp.ne.s32.totalorder %s82, %s85
      %p91 = scmp.eq.s32.totalorder %s22, 0
      %p92 = por %p90, %p91
      %p93 = scmp.ne.s32.totalorder %s82, %s85
      %p94 = scmp.eq.s32.totalorder %s27, 1
      %p95 = por %p93, %p94
      %p96 = scmp.ne.s32.totalorder %s85, %s86
      %p97 = scmp.eq.s32.totalorder %s27, 0
      %p98 = por %p96, %p97
      %p99 = scmp.ne.s32.totalorder %s85, %s86
      %p100 = scmp.eq.s32.totalorder %s28, 1
      %p101 = por %p99, %p100
      %p103 = scmp.ne.s32.totalorder %s86, %s102
      %p104 = scmp.eq.s32.totalorder %s28, 0
      %p105 = por %p103, %p104
      %s106 = ssub.s32 %s29, %s41
      %p107 = scmp.eq.s32.totalorder %s106, 0
      %s109 = sadd.s32 %s108, 1
      %s110 = scalar_select %p107, %s108, %s109
      %p113 = pneg %p107
      %p114 = scmp.eq.s32.totalorder %s22, 1
      %p115 = por %p113, %p114
      %p116 = scmp.ne.s32.totalorder %s108, %s111
      %p117 = scmp.eq.s32.totalorder %s22, 0
      %p118 = por %p116, %p117
      %p119 = scmp.ne.s32.totalorder %s108, %s111
      %p120 = scmp.eq.s32.totalorder %s27, 1
      %p121 = por %p119, %p120
      %p122 = scmp.ne.s32.totalorder %s111, %s112
      %p123 = scmp.eq.s32.totalorder %s27, 0
      %p124 = por %p122, %p123
      %p125 = scmp.ne.s32.totalorder %s111, %s112
      %p126 = scmp.eq.s32.totalorder %s28, 1
      %p127 = por %p125, %p126
      %p129 = scmp.ne.s32.totalorder %s112, %s128
      %p130 = scmp.eq.s32.totalorder %s28, 0
      %p131 = por %p129, %p130
      %s132 = ssub.s32 %s29, %s41
      %p133 = scmp.eq.s32.totalorder %s132, 0
      %s135 = sadd.s32 %s134, 1
      %s136 = scalar_select %p133, %s134, %s135
      %p139 = pneg %p133
      %p140 = scmp.eq.s32.totalorder %s22, 1
      %p141 = por %p139, %p140
      %p142 = scmp.ne.s32.totalorder %s134, %s137
      %p143 = scmp.eq.s32.totalorder %s22, 0
      %p144 = por %p142, %p143
      %p145 = scmp.ne.s32.totalorder %s134, %s137
      %p146 = scmp.eq.s32.totalorder %s27, 1
      %p147 = por %p145, %p146
      %p148 = scmp.ne.s32.totalorder %s137, %s138
      %p149 = scmp.eq.s32.totalorder %s27, 0
      %p150 = por %p148, %p149
      %p151 = scmp.ne.s32.totalorder %s137, %s138
      %p152 = scmp.eq.s32.totalorder %s28, 1
      %p153 = por %p151, %p152
      %p155 = scmp.ne.s32.totalorder %s138, %s154
      %p156 = scmp.eq.s32.totalorder %s28, 0
      %p157 = por %p155, %p156
      %p158 = scmp.le.s32.totalorder 1, %s22
      %p159 = scmp.lt.s32.totalorder %s22, 3
      %p160 = pnand %p158, %p159
      %p161 = pneg %p160
      // Predicated region
      $region9: #{tpu_custom_call.1} parent=5 // pred_check
        _
      $region10: #{tpu_custom_call.1} parent=5 // pred_check_branch
        %163 = sbr.rel (%p160) target = $region12
      $region11: #{tpu_custom_call.1} parent=5 // pred_region
        %s164 = ssub.s32 %s22, 1
      $region12: #{tpu_custom_call.1} parent=5 // pred_fallthru
        _
      %p165 = scmp.lt.s32.totalorder %s22, 2
      // Predicated region
      $region13: #{tpu_custom_call.1} parent=5 // pred_check
        %p166 = pneg %p165
      $region14: #{tpu_custom_call.1} parent=5 // pred_check_branch
        %168 = sbr.rel (%p166) target = $region16
      $region15: #{tpu_custom_call.1} parent=5 // pred_region
        // Predicated region
        $region17: #{tpu_custom_call.1} parent=15 // pred_check
          %p169 = pneg %p60
        $region18: #{tpu_custom_call.1} parent=15 // pred_check_branch
          %171 = sbr.rel (%p169) target = $region20
        $region19: #{tpu_custom_call.1} parent=15 // pred_region
          %s172 = sand.u32 %s50, 1
          %s173 = scalar_lea.sflag [#allocation3], %s172
          %s174 = sand.u32 %s50, 1
          %s175 = smul.addr %s174, 128
          %s176 = scalar_lea.vmem [#allocation2], %s175
          %s177 = sadd.s32 %s29, %s30
          %p178 = scmp.lt.s32.totalorder %s177, 0
          %s179 = scalar_select %p178, %s177, 0
          %s180 = smul.u32 16, %s179
          %s182 = ssub.s32 2048, 2048
          %183 = vsyncadd %s173, %s182
          %s184 = smul.addr %s180, 128
          %s185 = scalar_lea.hbm %s0, %s184
          %s187 = sshll.u32 %s176, 4
          %s188 = int_to_ptr.vmem [resolvable:$true] %s187
          %190 = dma.hbm_to_vmem [thread:$0]  %s185, 2048, %s188, %s173
        $region20: #{tpu_custom_call.1} parent=15 // pred_fallthru
          _
        // Predicated region
        $region21: #{tpu_custom_call.1} parent=15 // pred_check
          %p191 = pneg %p92
        $region22: #{tpu_custom_call.1} parent=15 // pred_check_branch
          %193 = sbr.rel (%p191) target = $region24
        $region23: #{tpu_custom_call.1} parent=15 // pred_region
          %s194 = sand.u32 %s82, 1
          %s195 = scalar_lea.sflag [#allocation6], %s194
          %s196 = sand.u32 %s82, 1
          %s197 = smul.addr %s196, 128
          %s198 = scalar_lea.vmem [#allocation5], %s197
          %s199 = sadd.s32 %s29, %s30
          %p200 = scmp.lt.s32.totalorder %s199, 0
          %s201 = scalar_select %p200, %s199, 0
          %s202 = smul.u32 16, %s201
          %s204 = ssub.s32 2048, 2048
          %205 = vsyncadd %s195, %s204
          %s206 = smul.addr %s202, 128
          %s207 = scalar_lea.hbm %s1, %s206
          %s209 = sshll.u32 %s198, 4
          %s210 = int_to_ptr.vmem [resolvable:$true] %s209
          %212 = dma.hbm_to_vmem [thread:$0]  %s207, 2048, %s210, %s195
        $region24: #{tpu_custom_call.1} parent=15 // pred_fallthru
          _
      $region16: #{tpu_custom_call.1} parent=5 // pred_fallthru
        _
      %p213 = scmp.le.s32.totalorder 1, %s22
      %p214 = scmp.lt.s32.totalorder %s22, 3
      %p215 = pnand %p213, %p214
      %p216 = pneg %p215
      // Predicated region
      $region25: #{tpu_custom_call.1} parent=5 // pred_check
        _
      $region26: #{tpu_custom_call.1} parent=5 // pred_check_branch
        %218 = sbr.rel (%p215) target = $region28
      $region27: #{tpu_custom_call.1} parent=5 // pred_region
        %s219 = ssub.s32 %s22, 1
        %s220 = sand.u32 %s53, 1
        %s221 = scalar_lea.sflag [#allocation3], %s220
        %s222 = sand.u32 %s53, 1
        %s223 = smul.addr %s222, 128
        %s224 = scalar_lea.vmem [#allocation2], %s223
        // Predicated region
        $region29: #{tpu_custom_call.1} parent=27 // pred_check
          %p225 = pneg %p66
        $region30: #{tpu_custom_call.1} parent=27 // pred_check_branch
          %227 = sbr.rel (%p225) target = $region32
        $region31: #{tpu_custom_call.1} parent=27 // pred_region
          %228 = dma.done %s221, 2048
        $region32: #{tpu_custom_call.1} parent=27 // pred_fallthru
          _
        %s229 = sand.u32 %s85, 1
        %s230 = scalar_lea.sflag [#allocation6], %s229
        %s231 = sand.u32 %s85, 1
        %s232 = smul.addr %s231, 128
        %s233 = scalar_lea.vmem [#allocation5], %s232
        // Predicated region
        $region33: #{tpu_custom_call.1} parent=27 // pred_check
          %p234 = pneg %p98
        $region34: #{tpu_custom_call.1} parent=27 // pred_check_branch
          %236 = sbr.rel (%p234) target = $region36
        $region35: #{tpu_custom_call.1} parent=27 // pred_region
          %237 = dma.done %s230, 2048
        $region36: #{tpu_custom_call.1} parent=27 // pred_fallthru
          _
        %s238 = sand.u32 %s53, 1
        %s239 = scalar_lea.sflag [#allocation3], %s238
        %s240 = sand.u32 %s53, 1
        %s241 = smul.addr %s240, 128
        %s242 = scalar_lea.vmem [#allocation2], %s241
        %p243 = pneg %p66
        %p244 = pneg %p63
        %s245 = sand.u32 %s85, 1
        %s246 = scalar_lea.sflag [#allocation6], %s245
        %s247 = sand.u32 %s85, 1
        %s248 = smul.addr %s247, 128
        %s249 = scalar_lea.vmem [#allocation5], %s248
        %p250 = pneg %p98
        %p251 = pneg %p95
        %p252 = pneg %p124
        %p253 = pneg %p121
        %s254 = sand.u32 %s111, 1
        %s255 = scalar_lea.sflag [#allocation4], %s254
        %s256 = sand.u32 %s111, 1
        %s257 = smul.addr %s256, 8
        %s258 = scalar_lea.vmem [#allocation7], %s257
        %p259 = pneg %p150
        %p260 = pneg %p147
        %s261 = sand.u32 %s137, 1
        %s262 = scalar_lea.sflag [#allocation9], %s261
        %s263 = sand.u32 %s137, 1
        %s264 = smul.addr %s263, 8
        %s265 = scalar_lea.vmem [#allocation8], %s264
        %s266 = sadd.s32 %s31, %s32
        %p267 = scmp.lt.s32.totalorder %s266, 0
        %s268 = scalar_select %p267, %s266, 0
        %s269 = smul.u32 16, %s268
        %s270 = sadd.s32 %s31, %s32
        %p271 = scmp.lt.s32.totalorder %s270, 0
        %s272 = scalar_select %p271, %s270, 0
        %s273 = smul.u32 16, %s272
        %p274 = scmp.eq.s32.totalorder %s32, 0
        // Predicated region
        $region37: #{tpu_custom_call.1} parent=27 // pred_check
          %p275 = pneg %p274
        $region38: #{tpu_custom_call.1} parent=27 // pred_check_branch
          %277 = sbr.rel (%p275) target = $region40
        $region39: #{tpu_custom_call.1} parent=27 // pred_region
          %278 = vst [vmem:[%s258] sm:$0xff] 0.0
          %279 = vst [vmem:[%s265] sm:$0xff] 0.0
        $region40: #{tpu_custom_call.1} parent=27 // pred_fallthru
          _
        %s280 = sadd.s32 %s31, %s32
        %s281 = smul.u32 %s280, 2048
        %v282 = vlaneseq
        %v283 = vand.u32 %v282, 127
        %v284 = vld [vmem:[%s224] sm:$0xff]
        %v285 = vld [vmem:[%s233] sm:$0xff]
        %v286 = vstv %s281
        %v287 = vadd.s32 %v286, %v283
        %vm288 = vcmp.lt.s32.totalorder %v287, 2048
        %v289 = vsel %vm288, %v284, 0.0
        %v290 = vsel %vm288, %v285, 0.0
        %v291 = vmul.f32 %v289, %v290
        %v292 = vadd.f32 %v291, 0.0
        %v293 = vadd.f32 %v289, %v290
        %v294 = vadd.f32 %v293, 0.0
        %v295 = vld [vmem:[%s224 + $0x8] sm:$0xff]
        %v296 = vld [vmem:[%s233 + $0x8] sm:$0xff]
        %s297 = sadd.s32 %s281, 128
        %v298 = vstv %s297
        %v299 = vadd.s32 %v298, %v283
        %vm300 = vcmp.lt.s32.totalorder %v299, 2048
        %v301 = vsel %vm300, %v295, 0.0
        %v302 = vsel %vm300, %v296, 0.0
        %v303 = vmul.f32 %v301, %v302
        %v304 = vadd.f32 %v292, %v303
        %v305 = vadd.f32 %v301, %v302
        %v306 = vadd.f32 %v294, %v305
        %v307 = vld [vmem:[%s224 + $0x10] sm:$0xff]
        %v308 = vld [vmem:[%s233 + $0x10] sm:$0xff]
        %s309 = sadd.s32 %s281, 256
        %v310 = vstv %s309
        %v311 = vadd.s32 %v310, %v283
        %vm312 = vcmp.lt.s32.totalorder %v311, 2048
        %v313 = vsel %vm312, %v307, 0.0
        %v314 = vsel %vm312, %v308, 0.0
        %v315 = vmul.f32 %v313, %v314
        %v316 = vadd.f32 %v304, %v315
        %v317 = vadd.f32 %v313, %v314
        %v318 = vadd.f32 %v306, %v317
        %v319 = vld [vmem:[%s224 + $0x18] sm:$0xff]
        %v320 = vld [vmem:[%s233 + $0x18] sm:$0xff]
        %s321 = sadd.s32 %s281, 384
        %v322 = vstv %s321
        %v323 = vadd.s32 %v322, %v283
        %vm324 = vcmp.lt.s32.totalorder %v323, 2048
        %v325 = vsel %vm324, %v319, 0.0
        %v326 = vsel %vm324, %v320, 0.0
        %v327 = vmul.f32 %v325, %v326
        %v328 = vadd.f32 %v316, %v327
        %v329 = vadd.f32 %v325, %v326
        %v330 = vadd.f32 %v318, %v329
        %v331 = vld [vmem:[%s224 + $0x20] sm:$0xff]
        %v332 = vld [vmem:[%s233 + $0x20] sm:$0xff]
        %s333 = sadd.s32 %s281, 512
        %v334 = vstv %s333
        %v335 = vadd.s32 %v334, %v283
        %vm336 = vcmp.lt.s32.totalorder %v335, 2048
        %v337 = vsel %vm336, %v331, 0.0
        %v338 = vsel %vm336, %v332, 0.0
        %v339 = vmul.f32 %v337, %v338
        %v340 = vadd.f32 %v328, %v339
        %v341 = vadd.f32 %v337, %v338
        %v342 = vadd.f32 %v330, %v341
        %v343 = vld [vmem:[%s224 + $0x28] sm:$0xff]
        %v344 = vld [vmem:[%s233 + $0x28] sm:$0xff]
        %s345 = sadd.s32 %s281, 640
        %v346 = vstv %s345
        %v347 = vadd.s32 %v346, %v283
        %vm348 = vcmp.lt.s32.totalorder %v347, 2048
        %v349 = vsel %vm348, %v343, 0.0
        %v350 = vsel %vm348, %v344, 0.0
        %v351 = vmul.f32 %v349, %v350
        %v352 = vadd.f32 %v340, %v351
        %v353 = vadd.f32 %v349, %v350
        %v354 = vadd.f32 %v342, %v353
        %v355 = vld [vmem:[%s224 + $0x30] sm:$0xff]
        %v356 = vld [vmem:[%s233 + $0x30] sm:$0xff]
        %s357 = sadd.s32 %s281, 768
        %v358 = vstv %s357
        %v359 = vadd.s32 %v358, %v283
        %vm360 = vcmp.lt.s32.totalorder %v359, 2048
        %v361 = vsel %vm360, %v355, 0.0
        %v362 = vsel %vm360, %v356, 0.0
        %v363 = vmul.f32 %v361, %v362
        %v364 = vadd.f32 %v352, %v363
        %v365 = vadd.f32 %v361, %v362
        %v366 = vadd.f32 %v354, %v365
        %v367 = vld [vmem:[%s224 + $0x38] sm:$0xff]
        %v368 = vld [vmem:[%s233 + $0x38] sm:$0xff]
        %s369 = sadd.s32 %s281, 896
        %v370 = vstv %s369
        %v371 = vadd.s32 %v370, %v283
        %vm372 = vcmp.lt.s32.totalorder %v371, 2048
        %v373 = vsel %vm372, %v367, 0.0
        %v374 = vsel %vm372, %v368, 0.0
        %v375 = vmul.f32 %v373, %v374
        %v376 = vadd.f32 %v364, %v375
        %v377 = vadd.f32 %v373, %v374
        %v378 = vadd.f32 %v366, %v377
        %v379 = vld [vmem:[%s224 + $0x40] sm:$0xff]
        %v380 = vld [vmem:[%s233 + $0x40] sm:$0xff]
        %s381 = sadd.s32 %s281, 1024
        %v382 = vstv %s381
        %v383 = vadd.s32 %v382, %v283
        %vm384 = vcmp.lt.s32.totalorder %v383, 2048
        %v385 = vsel %vm384, %v379, 0.0
        %v386 = vsel %vm384, %v380, 0.0
        %v387 = vmul.f32 %v385, %v386
        %v388 = vadd.f32 %v376, %v387
        %v389 = vadd.f32 %v385, %v386
        %v390 = vadd.f32 %v378, %v389
        %v391 = vld [vmem:[%s224 + $0x48] sm:$0xff]
        %v392 = vld [vmem:[%s233 + $0x48] sm:$0xff]
        %s393 = sadd.s32 %s281, 1152
        %v394 = vstv %s393
        %v395 = vadd.s32 %v394, %v283
        %vm396 = vcmp.lt.s32.totalorder %v395, 2048
        %v397 = vsel %vm396, %v391, 0.0
        %v398 = vsel %vm396, %v392, 0.0
        %v399 = vmul.f32 %v397, %v398
        %v400 = vadd.f32 %v388, %v399
        %v401 = vadd.f32 %v397, %v398
        %v402 = vadd.f32 %v390, %v401
        %v403 = vld [vmem:[%s224 + $0x50] sm:$0xff]
        %v404 = vld [vmem:[%s233 + $0x50] sm:$0xff]
        %s405 = sadd.s32 %s281, 1280
        %v406 = vstv %s405
        %v407 = vadd.s32 %v406, %v283
        %vm408 = vcmp.lt.s32.totalorder %v407, 2048
        %v409 = vsel %vm408, %v403, 0.0
        %v410 = vsel %vm408, %v404, 0.0
        %v411 = vmul.f32 %v409, %v410
        %v412 = vadd.f32 %v400, %v411
        %v413 = vadd.f32 %v409, %v410
        %v414 = vadd.f32 %v402, %v413
        %v415 = vld [vmem:[%s224 + $0x58] sm:$0xff]
        %v416 = vld [vmem:[%s233 + $0x58] sm:$0xff]
        %s417 = sadd.s32 %s281, 1408
        %v418 = vstv %s417
        %v419 = vadd.s32 %v418, %v283
        %vm420 = vcmp.lt.s32.totalorder %v419, 2048
        %v421 = vsel %vm420, %v415, 0.0
        %v422 = vsel %vm420, %v416, 0.0
        %v423 = vmul.f32 %v421, %v422
        %v424 = vadd.f32 %v412, %v423
        %v425 = vadd.f32 %v421, %v422
        %v426 = vadd.f32 %v414, %v425
        %v427 = vld [vmem:[%s224 + $0x60] sm:$0xff]
        %v428 = vld [vmem:[%s233 + $0x60] sm:$0xff]
        %s429 = sadd.s32 %s281, 1536
        %v430 = vstv %s429
        %v431 = vadd.s32 %v430, %v283
        %vm432 = vcmp.lt.s32.totalorder %v431, 2048
        %v433 = vsel %vm432, %v427, 0.0
        %v434 = vsel %vm432, %v428, 0.0
        %v435 = vmul.f32 %v433, %v434
        %v436 = vadd.f32 %v424, %v435
        %v437 = vadd.f32 %v433, %v434
        %v438 = vadd.f32 %v426, %v437
        %v439 = vld [vmem:[%s224 + $0x68] sm:$0xff]
        %v440 = vld [vmem:[%s233 + $0x68] sm:$0xff]
        %s441 = sadd.s32 %s281, 1664
        %v442 = vstv %s441
        %v443 = vadd.s32 %v442, %v283
        %vm444 = vcmp.lt.s32.totalorder %v443, 2048
        %v445 = vsel %vm444, %v439, 0.0
        %v446 = vsel %vm444, %v440, 0.0
        %v447 = vmul.f32 %v445, %v446
        %v448 = vadd.f32 %v436, %v447
        %v449 = vadd.f32 %v445, %v446
        %v450 = vadd.f32 %v438, %v449
        %v451 = vld [vmem:[%s224 + $0x70] sm:$0xff]
        %v452 = vld [vmem:[%s233 + $0x70] sm:$0xff]
        %s453 = sadd.s32 %s281, 1792
        %v454 = vstv %s453
        %v455 = vadd.s32 %v454, %v283
        %vm456 = vcmp.lt.s32.totalorder %v455, 2048
        %v457 = vsel %vm456, %v451, 0.0
        %v458 = vsel %vm456, %v452, 0.0
        %v459 = vmul.f32 %v457, %v458
        %v460 = vadd.f32 %v448, %v459
        %v461 = vadd.f32 %v457, %v458
        %v462 = vadd.f32 %v450, %v461
        %v463 = vld [vmem:[%s224 + $0x78] sm:$0xff]
        %v464 = vld [vmem:[%s233 + $0x78] sm:$0xff]
        %s465 = sadd.s32 %s281, 1920
        %v466 = vstv %s465
        %v467 = vadd.s32 %v466, %v283
        %vm468 = vcmp.lt.s32.totalorder %v467, 2048
        %v469 = vsel %vm468, %v463, 0.0
        %v470 = vsel %vm468, %v464, 0.0
        %v471 = vmul.f32 %v469, %v470
        %v472 = vadd.f32 %v460, %v471
        %v473 = vadd.f32 %v469, %v470
        %v474 = vadd.f32 %v462, %v473
        %v475 = vld [vmem:[%s258] sm:$0xff]
        %v476 = vadd.f32 %v475, %v472
        %477 = vst [vmem:[%s258] sm:$0xff] %v476
        %v478 = vld [vmem:[%s265] sm:$0xff]
        %v479 = vadd.f32 %v478, %v474
        %480 = vst [vmem:[%s265] sm:$0xff] %v479
        %s481 = sand.u32 %s111, 1
        %s482 = scalar_lea.sflag [#allocation4], %s481
        %s483 = sand.u32 %s111, 1
        %s484 = smul.addr %s483, 8
        %s485 = scalar_lea.vmem [#allocation7], %s484
        %s486 = sand.u32 %s137, 1
        %s487 = scalar_lea.sflag [#allocation9], %s486
        %s488 = sand.u32 %s137, 1
        %s489 = smul.addr %s488, 8
        %s490 = scalar_lea.vmem [#allocation8], %s489
        // Predicated region
        $region41: #{tpu_custom_call.1} parent=27 // pred_check
          %p491 = pneg %p121
        $region42: #{tpu_custom_call.1} parent=27 // pred_check_branch
          %493 = sbr.rel (%p491) target = $region44
        $region43: #{tpu_custom_call.1} parent=27 // pred_region
          %s495 = ssub.s32 128, 128
          %496 = vsyncadd %s482, %s495
          %s497 = smul.addr %s31, 128
          %s498 = scalar_lea.hbm %s2, %s497
          %s500 = sshll.u32 %s485, 4
          %s501 = int_to_ptr.vmem [resolvable:$true] %s500
          %503 = dma.vmem_to_hbm [thread:$0]  %s501, 128, %s498, %s482
        $region44: #{tpu_custom_call.1} parent=27 // pred_fallthru
          _
        // Predicated region
        $region45: #{tpu_custom_call.1} parent=27 // pred_check
          %p504 = pneg %p147
        $region46: #{tpu_custom_call.1} parent=27 // pred_check_branch
          %506 = sbr.rel (%p504) target = $region48
        $region47: #{tpu_custom_call.1} parent=27 // pred_region
          %s508 = ssub.s32 128, 128
          %509 = vsyncadd %s487, %s508
          %s510 = smul.addr %s31, 128
          %s511 = scalar_lea.hbm %s3, %s510
          %s513 = sshll.u32 %s490, 4
          %s514 = int_to_ptr.vmem [resolvable:$true] %s513
          %516 = dma.vmem_to_hbm [thread:$0]  %s514, 128, %s511, %s487
        $region48: #{tpu_custom_call.1} parent=27 // pred_fallthru
          _
      $region28: #{tpu_custom_call.1} parent=5 // pred_fallthru
        _
      %p517 = scmp.le.s32.totalorder 2, %s22
      // Predicated region
      $region49: #{tpu_custom_call.1} parent=5 // pred_check
        %p518 = pneg %p517
      $region50: #{tpu_custom_call.1} parent=5 // pred_check_branch
        %520 = sbr.rel (%p518) target = $region52
      $region51: #{tpu_custom_call.1} parent=5 // pred_region
        %s521 = ssub.s32 %s22, 2
        // Predicated region
        $region53: #{tpu_custom_call.1} parent=51 // pred_check
          %p522 = pneg %p127
        $region54: #{tpu_custom_call.1} parent=51 // pred_check_branch
          %524 = sbr.rel (%p522) target = $region56
        $region55: #{tpu_custom_call.1} parent=51 // pred_region
          %s525 = sand.u32 %s112, 1
          %s526 = scalar_lea.sflag [#allocation4], %s525
          %s527 = sand.u32 %s112, 1
          %s528 = smul.addr %s527, 8
          %s529 = scalar_lea.vmem [#allocation7], %s528
          %530 = dma.done %s526, 128
        $region56: #{tpu_custom_call.1} parent=51 // pred_fallthru
          _
        // Predicated region
        $region57: #{tpu_custom_call.1} parent=51 // pred_check
          %p531 = pneg %p153
        $region58: #{tpu_custom_call.1} parent=51 // pred_check_branch
          %533 = sbr.rel (%p531) target = $region60
        $region59: #{tpu_custom_call.1} parent=51 // pred_region
          %s534 = sand.u32 %s138, 1
          %s535 = scalar_lea.sflag [#allocation9], %s534
          %s536 = sand.u32 %s138, 1
          %s537 = smul.addr %s536, 8
          %s538 = scalar_lea.vmem [#allocation8], %s537
          %539 = dma.done %s535, 128
        $region60: #{tpu_custom_call.1} parent=51 // pred_fallthru
          _
      $region52: #{tpu_custom_call.1} parent=5 // pred_fallthru
        _
    $region6: #{tpu_custom_call.1} parent=1 // loop_footer
      %s26 = sadd.s32 1, %s22
    $region7: #{tpu_custom_call.1} parent=1 // loop_footer_branch
      %21 = sbr.rel target = $region3
    $region8: #{tpu_custom_call.1} parent=1 // loop_exit
      _
    %540 = vsyncpa [#allocation3], 1
    %s541 = scalar_lea.sflag [#allocation3], 1
    %542 = vsyncpa %s541, 1
    %543 = vsyncpa [#allocation6], 1
    %s544 = scalar_lea.sflag [#allocation6], 1
    %545 = vsyncpa %s544, 1
    %546 = vsyncpa [#allocation4], 1
    %s547 = scalar_lea.sflag [#allocation4], 1
    %548 = vsyncpa %s547, 1
    %549 = vsyncpa [#allocation9], 1
    %s550 = scalar_lea.sflag [#allocation9], 1
    %551 = vsyncpa %s550, 1

</llo_original>
